<compile_context>
chip_gen: v5e
topology: v5e:2x2
jax: 0.10.0
libtpu: 0.0.40
codegen_flags: <defaults>
</compile_context>

<pallas_src>
import functools

import jax
import jax.numpy as jnp
from jax.experimental import pallas as pl
from jax.experimental.pallas import tpu as pltpu


def _round_up(x, m):
    return (x + m - 1) // m * m


def _choose_time_block(T, B, H2, budget_bytes=8 << 20):
    """Largest divisor of T whose double-buffered per-block working set
    (pre f32 in + h bf16 out) fits the VMEM budget."""
    per_step = 2 * B * H2 * (4 + 2)          # double-buffered in + out per timestep
    cap = max(1, budget_bytes // per_step)
    if cap >= T:
        return T
    tt = int(cap)
    while T % tt:
        tt -= 1
    return tt


# ---------------------------------------------------------------------------
# Shared projection kernel:  o = x @ w + b   (bf16 operands, f32 accumulate)
# Used for both the hoisted input projection and the deferred output projection.
# ---------------------------------------------------------------------------
def _row_matmul_kernel(x_ref, w_ref, b_ref, o_ref):
    o_ref[...] = (
        jnp.dot(x_ref[...], w_ref[...], preferred_element_type=jnp.float32)
        + b_ref[...]
    ).astype(o_ref.dtype)


# ---------------------------------------------------------------------------
# Recurrent kernel (time-major): h_t = tanh(pre_t + h_{t-1} @ W_hh^T)
#   pre_ref   : (tt, Bc, H2) f32
#   whh_ref   : (H2, H2)     bf16
#   h_all_ref : (tt, Bc, H2) bf16 (feeds stage-3 matmul directly)
#   h_carry   : (Bc, H2)     f32 VMEM scratch, carried across time blocks
# ---------------------------------------------------------------------------
def _recurrent_kernel(pre_ref, whh_ref, h_all_ref, h_carry, *, tt):
    @pl.when(pl.program_id(1) == 0)
    def _init():
        # initial hidden state = zeros (MyRNN3.reset())
        h_carry[...] = jnp.zeros_like(h_carry)

    whh = whh_ref[...]                       # (H2, H2) bf16, block-resident
    h = h_carry[...]                         # (Bc, H2) f32

    def step(i, h):
        # one contiguous (Bc, H2) load, one dense store per timestep
        z = pre_ref[i] + jnp.dot(
            h.astype(whh.dtype), whh, preferred_element_type=jnp.float32)
        h = jnp.tanh(z)
        h_all_ref[i] = h.astype(h_all_ref.dtype)
        return h

    # TODO(synk): for H2 <= ~64 the MXU round-trip dominates this serial chain;
    # a VPU broadcast-FMA formulation (or lane-padding H2 to 128) would help.
    if tt <= 16:
        for i in range(tt):                  # full static unroll: small code size
            h = step(i, h)
    else:
        # bound vreg live ranges / code size, keep overlap visible to the scheduler
        h = jax.lax.fori_loop(0, tt, step, h, unroll=8)

    h_carry[...] = h                         # carry hidden state to next time block


def my_rnn3_forward(x, w_ih, w_hh, b_ih, b_hh, w_out, b_out,
                    *, time_block=None, row_block=256, batch_cores=None):
    """x: (B, T, H1) float32.  Weights follow PyTorch conventions:
       w_ih (H2, H1), w_hh (H2, H2), b_ih (H2,), b_hh (H2,),
       w_out (O, H2), b_out (O,).  Returns (B, T, O).  Initial hidden = zeros.

    TODO(synk): MyRNN3 keeps self.hidden across forward() calls; here every call
    starts from zeros (reset() semantics). Plumb an h0 argument to carry state."""
    B, T, H1 = x.shape
    H2 = w_hh.shape[0]
    O = w_out.shape[0]
    f32, bf16 = jnp.float32, jnp.bfloat16

    # ---- one-time weight prep: transpose, fuse RNN biases, bf16 MXU operands,
    #      lane-pad the output projection to a multiple of 128 (lane-dense stores).
    O_pad = _round_up(O, 128)
    wih_bf = jnp.transpose(w_ih).astype(bf16)                                 # (H1, H2)
    whh_bf = jnp.transpose(w_hh).astype(bf16)                                 # (H2, H2)
    wout_bf = jnp.pad(jnp.transpose(w_out), ((0, 0), (0, O_pad - O))).astype(bf16)
    b_in = (b_ih + b_hh).astype(f32).reshape(1, H2)                           # fused bias
    b_o = jnp.pad(b_out.astype(f32), (0, O_pad - O)).reshape(1, O_pad)

    # ---- flatten (B, T) into one M axis, time-major, so both projections tile
    #      over big row blocks and the recurrence sees contiguous (B, H2) steps.
    M = B * T
    TM = min(row_block, _round_up(M, 8))
    M_pad = _round_up(M, TM)
    x_flat = jnp.transpose(x, (1, 0, 2)).reshape(M, H1).astype(bf16)
    if M_pad != M:
        x_flat = jnp.pad(x_flat, ((0, M_pad - M), (0, 0)))
    grid_m = M_pad // TM
    proj_params = pltpu.CompilerParams(dimension_semantics=("parallel",))

    # ---- stage 1: pre = x @ W_ih^T + (b_ih + b_hh)   (hoisted off serial path)
    pre_flat = pl.pallas_call(
        _row_matmul_kernel,
        out_shape=jax.ShapeDtypeStruct((M_pad, H2), f32),
        grid_spec=pltpu.PrefetchScalarGridSpec(
            num_scalar_prefetch=0,
            grid=(grid_m,),
            in_specs=[
                pl.BlockSpec((TM, H1), lambda m: (m, 0)),
                pl.BlockSpec((H1, H2), lambda m: (0, 0)),
                pl.BlockSpec((1, H2), lambda m: (0, 0)),
            ],
            out_specs=pl.BlockSpec((TM, H2), lambda m: (m, 0)),
        ),
        compiler_params=proj_params,
    )(x_flat, wih_bf, b_in)

    pre = pre_flat[:M].reshape(T, B, H2)                 # time-major (T, B, H2)

    # ---- stage 2: serial recurrence, time-blocked, hidden carried in VMEM ----
    tt = _choose_time_block(T, B, H2) if time_block is None else time_block
    assert T % tt == 0, "time_block must divide T"

    if batch_cores is None:
        # split the recurrence across 2 TensorCores (v7x) only when each chunk
        # keeps 8-aligned sublane tiles; otherwise stay on one core.
        batch_cores = 2 if (B % 2 == 0 and (B // 2) % 8 == 0) else 1
    C = batch_cores
    assert B % C == 0 and (C == 1 or (B // C) % 8 == 0), (
        "batch_cores must divide B into 8-aligned chunks")
    Bc = B // C

    h_all = pl.pallas_call(
        functools.partial(_recurrent_kernel, tt=tt),
        out_shape=jax.ShapeDtypeStruct((T, B, H2), bf16),
        grid_spec=pltpu.PrefetchScalarGridSpec(
            num_scalar_prefetch=0,
            grid=(C, T // tt),
            in_specs=[
                pl.BlockSpec((tt, Bc, H2), lambda c, t: (t, c, 0)),
                pl.BlockSpec((H2, H2), lambda c, t: (0, 0)),
            ],
            out_specs=pl.BlockSpec((tt, Bc, H2), lambda c, t: (t, c, 0)),
            scratch_shapes=[pltpu.VMEM((Bc, H2), f32)],
        ),
        compiler_params=pltpu.CompilerParams(
            dimension_semantics=("parallel", "arbitrary"),   # batch-parallel, time-serial
            vmem_limit_bytes=32 * 1024 * 1024,
        ),
    )(pre, whh_bf)

    # ---- stage 3: y = h @ W_out^T + b_out   (deferred, lane-dense O_pad) -----
    h_flat = h_all.reshape(M, H2)
    if M_pad != M:
        h_flat = jnp.pad(h_flat, ((0, M_pad - M), (0, 0)))

    y_flat = pl.pallas_call(
        _row_matmul_kernel,
        out_shape=jax.ShapeDtypeStruct((M_pad, O_pad), f32),
        grid_spec=pltpu.PrefetchScalarGridSpec(
            num_scalar_prefetch=0,
            grid=(grid_m,),
            in_specs=[
                pl.BlockSpec((TM, H2), lambda m: (m, 0)),
                pl.BlockSpec((H2, O_pad), lambda m: (0, 0)),
                pl.BlockSpec((1, O_pad), lambda m: (0, 0)),
            ],
            out_specs=pl.BlockSpec((TM, O_pad), lambda m: (m, 0)),
        ),
        compiler_params=proj_params,
    )(h_flat, wout_bf, b_o)

    y = y_flat[:M, :O].reshape(T, B, O)
    return jnp.transpose(y, (1, 0, 2))                    # back to batch-first (B, T, O)


def _reference_forward(x, w_ih, w_hh, b_ih, b_hh, w_out, b_out):
    B, T, H1 = x.shape
    H2 = w_hh.shape[0]
    h = jnp.zeros((B, H2), jnp.float32)
    ys = []
    for t in range(T):
        h = jnp.tanh(x[:, t, :] @ w_ih.T + b_ih + h @ w_hh.T + b_hh)
        ys.append(h @ w_out.T + b_out)
    return jnp.stack(ys, axis=1)


if __name__ == "__main__":
    B, T = 2, 8
    H1, H2, O = 32, 32, 16

    key = jax.random.PRNGKey(0)
    kx, k1, k2, k3, k4, k5, k6 = jax.random.split(key, 7)

    x = jax.random.normal(kx, (B, T, H1), jnp.float32)
    # deterministic synthetic parameters (PyTorch nn.RNN / nn.Linear shapes)
    s1 = 1.0 / jnp.sqrt(H2)
    w_ih = jax.random.uniform(k1, (H2, H1), jnp.float32, -s1, s1)
    w_hh = jax.random.uniform(k2, (H2, H2), jnp.float32, -s1, s1)
    b_ih = jax.random.uniform(k3, (H2,), jnp.float32, -s1, s1)
    b_hh = jax.random.uniform(k4, (H2,), jnp.float32, -s1, s1)
    w_out = jax.random.uniform(k5, (O, H2), jnp.float32, -s1, s1)
    b_out = jax.random.uniform(k6, (O,), jnp.float32, -s1, s1)

    y = my_rnn3_forward(x, w_ih, w_hh, b_ih, b_hh, w_out, b_out)
    y = jax.block_until_ready(y)

    y_ref = _reference_forward(x, w_ih, w_hh, b_ih, b_hh, w_out, b_out)
    assert y.shape == (B, T, O)
    # bf16 MXU operands with f32 accumulation -> looser tolerance than pure f32.
    err = float(jnp.max(jnp.abs(y - y_ref)))
    assert jnp.allclose(y, y_ref, atol=5e-2, rtol=5e-2), err

    print("KERNEL_OK")
</pallas_src>

<mosaic_0001>
module attributes {stable_mosaic.version = 11 : i64} {
  func.func @_row_matmul_kernel(%arg0: i32, %arg1: memref<16x32xbf16, #tpu.memory_space<vmem>>, %arg2: memref<32x32xbf16, #tpu.memory_space<vmem>>, %arg3: memref<1x32xf32, #tpu.memory_space<vmem>>, %arg4: memref<16x32xf32, #tpu.memory_space<vmem>>) attributes {dimension_semantics = [#tpu.dimension_semantics<parallel>], iteration_bounds = array<i64: 1>, scalar_prefetch = 0 : i64, scratch_operands = 0 : i64, tpu.core_type = #tpu.core_type<tc>, window_params = [{transform_indices = @transform_0, window_bounds = array<i64: 16, 32>}, {pipeline_mode = #tpu.pipeline_mode<synchronous>, transform_indices = @transform_1, window_bounds = array<i64: 32, 32>}, {pipeline_mode = #tpu.pipeline_mode<synchronous>, transform_indices = @transform_2, window_bounds = array<i64: 1, 32>}, {transform_indices = @transform_3, window_bounds = array<i64: 16, 32>}]} {
    %c0 = arith.constant 0 : index
    %c0_0 = arith.constant 0 : index
    %0 = vector.load %arg1[%c0, %c0_0] : memref<16x32xbf16, #tpu.memory_space<vmem>>, vector<16x32xbf16>
    %c0_1 = arith.constant 0 : index
    %c0_2 = arith.constant 0 : index
    %1 = vector.load %arg2[%c0_1, %c0_2] : memref<32x32xbf16, #tpu.memory_space<vmem>>, vector<32x32xbf16>
    %cst = arith.constant dense<0.000000e+00> : vector<16x32xf32>
    %2 = tpu.matmul %0, %1, %cst {dimension_numbers = #tpu.dot_dimension_numbers<[1], [0], [0], [1], [0, 0, 1, 1], [], []>} : vector<16x32xbf16>, vector<32x32xbf16>, vector<16x32xf32> -> vector<16x32xf32>
    %c0_3 = arith.constant 0 : index
    %c0_4 = arith.constant 0 : index
    %3 = vector.load %arg3[%c0_3, %c0_4] : memref<1x32xf32, #tpu.memory_space<vmem>>, vector<1x32xf32>
    %4 = vector.broadcast %3 : vector<1x32xf32> to vector<16x32xf32>
    %5 = arith.addf %2, %4 : vector<16x32xf32>
    %c0_5 = arith.constant 0 : index
    %c0_6 = arith.constant 0 : index
    %6 = vector.load %arg4[%c0_5, %c0_6] : memref<16x32xf32, #tpu.memory_space<vmem>>, vector<16x32xf32>
    tpu.vector_store %arg4[%c0_5, %c0_6], %5 {strides = array<i32>} : memref<16x32xf32, #tpu.memory_space<vmem>>, vector<16x32xf32>,
    return
  }
  func.func @transform_0(%arg0: i32) -> (i32, i32) {
    %c0_i32 = arith.constant 0 : i32
    %c0_i32_0 = arith.constant 0 : i32
    return %arg0, %c0_i32 : i32, i32
  }
  func.func @transform_1(%arg0: i32) -> (i32, i32) {
    %c0_i32 = arith.constant 0 : i32
    %c0_i32_0 = arith.constant 0 : i32
    %c0_i32_1 = arith.constant 0 : i32
    return %c0_i32, %c0_i32_0 : i32, i32
  }
  func.func @transform_2(%arg0: i32) -> (i32, i32) {
    %c0_i32 = arith.constant 0 : i32
    %c0_i32_0 = arith.constant 0 : i32
    %c0_i32_1 = arith.constant 0 : i32
    return %c0_i32, %c0_i32_0 : i32, i32
  }
  func.func @transform_3(%arg0: i32) -> (i32, i32) {
    %c0_i32 = arith.constant 0 : i32
    %c0_i32_0 = arith.constant 0 : i32
    return %arg0, %c0_i32 : i32, i32
  }
}

</mosaic_0001>

<llo_original>
// kernel: tpu_custom_call.1
$region0: #{tpu_custom_call.1}
  #allocation0 [shape = 'u32[]', space=smem, size = 0x4, offset = 0x4, fixed_abs, tag = 'smem constant byte address 0x4 - core index']
  #allocation1 [shape = 'u32[72,128]{1,0:T(1,128)}', space=vmem, size = 0x9000, scoped, tag = 'internal scratch']
  %s0 = inlined_call_operand.hbm [shape: bf16[16,32], index: 0, kind: input, shape index: {}]
  %s1 = inlined_call_operand.hbm [shape: bf16[32,32], index: 1, kind: input, shape index: {}]
  %s2 = inlined_call_operand.vmem [shape: f32[1,32], index: 2, kind: input, shape index: {}]
  %s3 = inlined_call_operand.hbm [shape: f32[16,32], index: 3, kind: output, shape index: {}]
  %s4 = sld [smem:[#allocation0]]
  $region30: #{tpu_custom_call.1} parent=0
    _
  %s6 = ssub.s32 1, %s4
  %s7 = scalar_select 0, %s6, %s4
  $region1: #{tpu_custom_call.1} parent=0
    #allocation2 [shape = 'u8[4096]{0}', space=vmem, size = 0x1000, scoped, tag = 'input window, operand 0, single buffered']
    #allocation3 [shape = 's32[1]{0}', space=sflag, size = 0x4, scoped, tag = 'scoped memory for tpu_custom_call.1']
    #allocation4 [shape = 's32[1]{0}', space=sflag, size = 0x4, scoped, tag = 'scoped memory for tpu_custom_call.1']
    #allocation5 [shape = 'u8[8192]{0}', space=vmem, size = 0x2000, scoped, tag = 'input window, operand 1, single buffered']
    #allocation6 [shape = 's32[1]{0}', space=sflag, size = 0x4, scoped, tag = 'scoped memory for tpu_custom_call.1']
    #allocation7 [shape = 'u8[8192]{0}', space=vmem, size = 0x2000, scoped, tag = 'output window, operand 0, single buffered']
    %8 = vsyncpa [#allocation3], 0
    %9 = vsyncpa [#allocation6], 0
    %10 = vsyncpa [#allocation4], 0
    // Predicated region
    $region2: #{tpu_custom_call.1} parent=1 // pred_check
      _
    $region3: #{tpu_custom_call.1} parent=1 // pred_check_branch
      %12 = sbr.rel (0) target = $region5
    $region4: #{tpu_custom_call.1} parent=1 // pred_region
      %14 = vsyncadd [#allocation3], 0
      %s15 = sshll.u32 %s0, 4
      %s16 = int_to_ptr.hbm [resolvable:$true] %s15
      %s17 = sshll.u32 [#allocation2], 4
      %s18 = int_to_ptr.vmem [resolvable:$true] %s17
      %23 = dma.hbm_to_vmem [thread:$0]  %s16, 128, %s18, [#allocation3], 64, 64, 4
    $region5: #{tpu_custom_call.1} parent=1 // pred_fallthru
      _
    // Predicated region
    $region6: #{tpu_custom_call.1} parent=1 // pred_check
      _
    $region7: #{tpu_custom_call.1} parent=1 // pred_check_branch
      %25 = sbr.rel (0) target = $region9
    $region8: #{tpu_custom_call.1} parent=1 // pred_region
      %27 = vsyncadd [#allocation6], 0
      %s28 = sshll.u32 %s1, 4
      %s29 = int_to_ptr.hbm [resolvable:$true] %s28
      %s30 = sshll.u32 [#allocation5], 4
      %s31 = int_to_ptr.vmem [resolvable:$true] %s30
      %36 = dma.hbm_to_vmem [thread:$0]  %s29, 256, %s31, [#allocation6], 64, 64, 4
    $region9: #{tpu_custom_call.1} parent=1 // pred_fallthru
      _
    // Predicated region
    $region10: #{tpu_custom_call.1} parent=1 // pred_check
      _
    $region11: #{tpu_custom_call.1} parent=1 // pred_check_branch
      %38 = sbr.rel (0) target = $region13
    $region12: #{tpu_custom_call.1} parent=1 // pred_region
      _
    $region13: #{tpu_custom_call.1} parent=1 // pred_fallthru
      _
    // Predicated region
    $region14: #{tpu_custom_call.1} parent=1 // pred_check
      _
    $region15: #{tpu_custom_call.1} parent=1 // pred_check_branch
      %40 = sbr.rel (0) target = $region17
    $region16: #{tpu_custom_call.1} parent=1 // pred_region
      %42 = dma.done [#allocation3], 128
    $region17: #{tpu_custom_call.1} parent=1 // pred_fallthru
      _
    // Predicated region
    $region18: #{tpu_custom_call.1} parent=1 // pred_check
      _
    $region19: #{tpu_custom_call.1} parent=1 // pred_check_branch
      %44 = sbr.rel (0) target = $region21
    $region20: #{tpu_custom_call.1} parent=1 // pred_region
      %46 = dma.done [#allocation6], 256
    $region21: #{tpu_custom_call.1} parent=1 // pred_fallthru
      _
    %v48 = vld [vmem:[#allocation2] sm:$0xf]
    %v49 = vld [vmem:[#allocation2 + $0x4] sm:$0xf]
    %v50 = vld [vmem:[#allocation5] sm:$0xf]
    %v51 = vld [vmem:[#allocation5 + $0x4] sm:$0xf]
    %v52 = vld [vmem:[#allocation5 + $0x8] sm:$0xf]
    %v53 = vld [vmem:[#allocation5 + $0xc] sm:$0xf]
    %v54 = vld [vmem:[%s2] sm:$0x1]
    %v56 = vperm.slane %v54, 0
    %v60 = vunpack.c.l.b16 %v48
    %v61 = vunpack.c.l.b16 %v49
    %v62 = vpack.c.b16 %v61, %v60
    %v67 = vunpack.c.l.b16 %v50
    %v68 = vunpack.c.l.b16 %v51
    %v69 = vunpack.c.l.b16 %v52
    %v70 = vunpack.c.l.b16 %v53
    %v71 = vpack.c.b16 %v68, %v67
    %v72 = vpack.c.b16 %v70, %v69
    %vm75 = vcmask 261120
    %v77 = vsel %vm75, %v62, 0
    %79 = vmatpush.bf16.msra.mxu0 0
    %80 = vmatpush.bf16.msra.mxu0 0
    %81 = vmatpush.bf16.msra.mxu0 0
    %82 = vmatpush.bf16.msra.mxu0 0
    %83 = vmatpush.bf16.msra.mxu0 0
    %84 = vmatpush.bf16.msra.mxu0 0
    %85 = vmatpush.bf16.msra.mxu0 %v72
    %86 = vmatpush.bf16.msra.mxu0 %v71
    %87 = vmatmul.bf16.gmra.mxu0 %v77
    %v88 = vpop.f32.mrf.mxu0
    %v89 = vadd.f32 %v56, %v88
    %v90 = vpop.f32.mrf.mxu0
    %v91 = vadd.f32 %v56, %v90
    %92 = vdwg.mxu0
    %93 = vst.msk [vmem:[#allocation7] sm:$0xff] %vm75, %v89
    %94 = vst.msk [vmem:[#allocation7 + $0x8] sm:$0xff] %vm75, %v91
    // Predicated region
    $region22: #{tpu_custom_call.1} parent=1 // pred_check
      _
    $region23: #{tpu_custom_call.1} parent=1 // pred_check_branch
      %96 = sbr.rel (0) target = $region25
    $region24: #{tpu_custom_call.1} parent=1 // pred_region
      %98 = vsyncadd [#allocation4], 0
      %s99 = sshll.u32 [#allocation7], 4
      %s100 = int_to_ptr.vmem [resolvable:$true] %s99
      %s101 = sshll.u32 %s3, 4
      %s102 = int_to_ptr.hbm [resolvable:$true] %s101
      %107 = dma.vmem_to_hbm [thread:$0]  %s100, 256, %s102, [#allocation4], 128, 128, 8
    $region25: #{tpu_custom_call.1} parent=1 // pred_fallthru
      _
    // Predicated region
    $region26: #{tpu_custom_call.1} parent=1 // pred_check
      _
    $region27: #{tpu_custom_call.1} parent=1 // pred_check_branch
      %109 = sbr.rel (0) target = $region29
    $region28: #{tpu_custom_call.1} parent=1 // pred_region
      %111 = dma.done [#allocation4], 256
    $region29: #{tpu_custom_call.1} parent=1 // pred_fallthru
      _
    %112 = vsyncpa [#allocation3], 1
    %113 = vsyncpa [#allocation6], 1
    %114 = vsyncpa [#allocation4], 1

</llo_original>
